<compile_context>
chip_gen: v7x
topology: tpu7x:2x2x1
jax: 0.10.0
libtpu: 0.0.40
codegen_flags: <defaults>
</compile_context>

<pallas_src>
import functools

import jax
import jax.numpy as jnp
from jax.experimental import pallas as pl
from jax.experimental.pallas import tpu as pltpu


def _cdiv(a, b):
    return (a + b - 1) // b


def _round_up(x, m):
    return (x + m - 1) // m * m


# ---------------------------------------------------------------------------
# Kernels
# ---------------------------------------------------------------------------
def _gemm_bias_kernel(x_ref, w_ref, b_ref, o_ref):
    """K untiled: single MXU matmul + bias.  No scratch accumulator."""
    # x_ref: (K, tm)  activation tile, lanes = flattened (ho, wo)
    # w_ref: (tn, K)  weight tile (resident when tn == Cout)
    # b_ref: (tn, 1)  bias column
    # o_ref: (tn, tm) NCHW-flat output tile
    o_ref[...] = (
        jnp.dot(w_ref[...], x_ref[...], preferred_element_type=jnp.float32)
        + b_ref[...]
    ).astype(o_ref.dtype)


def _gemm_bias_acc_kernel(x_ref, w_ref, b_ref, o_ref, acc_ref):
    """K grid-tiled (axis 3): f32 accumulator, initialized with the bias."""
    kb = pl.program_id(3)

    @pl.when(kb == 0)
    def _():
        acc_ref[...] = jnp.broadcast_to(
            b_ref[...], acc_ref.shape).astype(jnp.float32)

    acc_ref[...] += jnp.dot(w_ref[...], x_ref[...],
                            preferred_element_type=jnp.float32)

    @pl.when(kb == pl.num_programs(3) - 1)
    def _():
        o_ref[...] = acc_ref[...].astype(o_ref.dtype)


# ---------------------------------------------------------------------------
# Tile selection (all trace-time Python on static shapes)
# ---------------------------------------------------------------------------
def _pick_tm(Msp, cap=512):
    # Lane (spatial) tile.  Full extent when small (always legal), else a
    # multiple of 128 with a ragged last block.  (v6e could push this to 1024
    # with a raised VMEM limit; 512 is safe on all of v5e/v6e/v7x.)
    return Msp if Msp <= cap else cap


def _pick_tn(Cout, K):
    # Keep the whole weight resident in VMEM (single Cout block) whenever its
    # double-buffered footprint is modest; a single n-block also means the
    # activation stream is read exactly once over the whole grid.
    if Cout <= 256 or (Cout <= 2048 and 2 * Cout * K * 4 <= 16 * 1024 * 1024):
        return Cout
    return 256


def _pick_tk(K, cap):
    # K untiled when small (full-dim blocks are always layout-legal).  When
    # tiled, tk must be a multiple of 128 (it is the lane dim of the weight
    # block) and must divide K exactly (the reduction dim must never be ragged).
    if K <= cap:
        return K
    start = min(cap, K) // 128 * 128
    for cand in range(start, 127, -128):
        if K % cand == 0:
            return cand
    return K  # irregular K: keep untiled; VMEM use is guarded below


def _shrink_for_vmem(tm, tn, tk, budget):
    # Guard against the untiled-irregular-K fallback blowing past the scoped
    # VMEM budget (v7x has only 64 MiB physical / 32 MiB default scoped).
    def est(tm_, tn_):
        # double-buffered x, w, bias + double-buffered out + acc scratch
        return 4 * (2 * tk * tm_ + 2 * tn_ * tk + 2 * tn_ + 3 * tn_ * tm_)

    while est(tm, tn) > budget and tm > 128:
        tm = max(128, _round_up(tm // 2, 128))
    while est(tm, tn) > budget and tn > 8:
        tn = max(8, _round_up(tn // 2, 8))
    return tm, tn


# ---------------------------------------------------------------------------
# (Cout, K) @ (K, Ho*Wo) + bias, per batch element.  Output is NCHW-flat.
# ---------------------------------------------------------------------------
def _patch_gemm(xt, w2, b2, k_tile_cap, allow_fusion):
    B, K, Msp = xt.shape
    Cout = w2.shape[0]

    tm = _pick_tm(Msp)
    tn = _pick_tn(Cout, K)
    tk = _pick_tk(K, k_tile_cap)
    tm, tn = _shrink_for_vmem(tm, tn, tk, budget=36 * 1024 * 1024)

    n_mb = _cdiv(Msp, tm)
    n_nb = _cdiv(Cout, tn)
    n_kb = K // tk  # tk always divides K (or equals K)

    # v7x megacore: make sure the parallel grid has >= 2 iterations so both
    # TensorCores get work even for batch-1 / single-tile shapes.
    if B * n_mb * n_nb < 2 and Msp >= 256:
        tm = _round_up(_cdiv(Msp, 2), 128)
        n_mb = _cdiv(Msp, tm)

    cost = pl.CostEstimate(
        flops=2 * B * Msp * K * Cout,
        transcendentals=0,
        bytes_accessed=4 * (B * K * Msp + Cout * K + Cout + B * Cout * Msp),
    )

    # Ask XLA to fuse the space-to-depth producer into the activation operand
    # (best effort; the caller falls back to allow_fusion=False on failure).
    fusion = [True, False, False] if allow_fusion else None

    if n_kb == 1:
        # Common case: K = C*p*p fits in one block -> no accumulator scratch.
        grid_spec = pltpu.PrefetchScalarGridSpec(
            num_scalar_prefetch=0,
            grid=(B, n_mb, n_nb),
            in_specs=[
                pl.BlockSpec((None, K, tm), lambda b, mb, nb: (b, 0, mb)),
                pl.BlockSpec((tn, K), lambda b, mb, nb: (nb, 0)),
                pl.BlockSpec((tn, 1), lambda b, mb, nb: (nb, 0)),
            ],
            out_specs=pl.BlockSpec((None, tn, tm), lambda b, mb, nb: (b, nb, mb)),
        )
        kernel = _gemm_bias_kernel
        sem = ("parallel", "parallel", "parallel")
    else:
        grid_spec = pltpu.PrefetchScalarGridSpec(
            num_scalar_prefetch=0,
            grid=(B, n_mb, n_nb, n_kb),
            in_specs=[
                pl.BlockSpec((None, tk, tm), lambda b, mb, nb, kb: (b, kb, mb)),
                pl.BlockSpec((tn, tk), lambda b, mb, nb, kb: (nb, kb)),
                pl.BlockSpec((tn, 1), lambda b, mb, nb, kb: (nb, 0)),
            ],
            out_specs=pl.BlockSpec((None, tn, tm),
                                   lambda b, mb, nb, kb: (b, nb, mb)),
            scratch_shapes=[pltpu.VMEM((tn, tm), jnp.float32)],
        )
        kernel = _gemm_bias_acc_kernel
        sem = ("parallel", "parallel", "parallel", "arbitrary")

    return pl.pallas_call(
        kernel,
        out_shape=jax.ShapeDtypeStruct((B, Cout, Msp), xt.dtype),
        grid_spec=grid_spec,
        compiler_params=pltpu.CompilerParams(
            dimension_semantics=sem,
            vmem_limit_bytes=48 * 1024 * 1024,
            allow_input_fusion=fusion,
        ),
        cost_estimate=cost,
    )(xt, w2, b2)


# ---------------------------------------------------------------------------
# Public forward: reproduces PatchConv.forward (NCHW in, NCHW out).
# ---------------------------------------------------------------------------
@functools.partial(jax.jit,
                   static_argnames=("patch_size", "k_tile_cap", "allow_fusion"))
def patch_conv_forward(x, weight, bias, patch_size=2, k_tile_cap=2048,
                       allow_fusion=True):
    """x: (B, C, H, W); weight: (Cout, C*p*p, 1, 1); bias: (Cout,).
    Returns (B, Cout, H'//p, W'//p) after the module's padding rule."""
    p = patch_size
    B, C, H, W = x.shape

    # Exact PyTorch-module semantics: if either dim is non-divisible, pad BOTH
    # dims by (p - dim % p) -- a full extra patch when that dim already divides.
    if (H % p != 0) or (W % p != 0):
        pad_h = p - H % p
        pad_w = p - W % p
        x = jnp.pad(x, ((0, 0), (0, 0), (0, pad_h), (0, pad_w)))
        B, C, H, W = x.shape

    Ho, Wo = H // p, W // p
    K = C * p * p
    Msp = Ho * Wo
    Cout = weight.shape[0]

    # Single fused space-to-depth pre-pass: NCHW -> (B, C*p*p, Ho*Wo) with
    # k = c*p*p + ph*p + pw (matches unfold/unfold/permute) and m = ho*Wo + wo.
    # TODO(synk): fold this relayout into the kernel's input fetch entirely.
    xt = (x.reshape(B, C, Ho, p, Wo, p)
            .transpose(0, 1, 3, 5, 2, 4)
            .reshape(B, K, Msp))

    w2 = weight.reshape(Cout, K)
    b2 = bias.reshape(Cout, 1)

    out3 = _patch_gemm(xt, w2, b2, k_tile_cap, allow_fusion)  # (B, Cout, Msp)
    # Free reshape back to NCHW (no post transpose / no channel padding).
    return out3.reshape(B, Cout, Ho, Wo)


def _forward_with_fallback(x, weight, bias, patch_size, k_tile_cap):
    """allow_input_fusion is best-effort: fall back to the plain call if the
    fused variant fails to compile on this chip/toolchain."""
    try:
        out = patch_conv_forward(x, weight, bias, patch_size=patch_size,
                                 k_tile_cap=k_tile_cap, allow_fusion=True)
        return jax.block_until_ready(out)
    except Exception:
        out = patch_conv_forward(x, weight, bias, patch_size=patch_size,
                                 k_tile_cap=k_tile_cap, allow_fusion=False)
        return jax.block_until_ready(out)


# ---------------------------------------------------------------------------
# Parameter init (matches nn.Conv2d(C*p*p, Cout, 1) default init ranges).
# ---------------------------------------------------------------------------
def init_patch_conv_params(key, in_channels, out_channels, patch_size=2):
    k_in = in_channels * patch_size * patch_size
    kw, kb = jax.random.split(key)
    bound = 1.0 / (k_in ** 0.5)
    weight = jax.random.uniform(
        kw, (out_channels, k_in, 1, 1), jnp.float32, -bound, bound)
    bias = jax.random.uniform(kb, (out_channels,), jnp.float32, -bound, bound)
    return weight, bias


def _reference_forward(x, weight, bias, patch_size=2):
    """Independent pure-JAX reference: PatchConv is exactly a stride-p conv
    with the 1x1 weight reshaped to (Cout, C, p, p) -- this cross-checks the
    k = c*p*p + ph*p + pw ordering without sharing the GEMM formulation."""
    p = patch_size
    B, C, H, W = x.shape
    if (H % p != 0) or (W % p != 0):
        x = jnp.pad(x, ((0, 0), (0, 0), (0, p - H % p), (0, p - W % p)))
    Cout = weight.shape[0]
    wconv = weight.reshape(Cout, C, p, p)
    out = jax.lax.conv_general_dilated(
        x, wconv, window_strides=(p, p), padding="VALID",
        dimension_numbers=("NCHW", "OIHW", "NCHW"))
    return out + bias[None, :, None, None]


if __name__ == "__main__":
    key = jax.random.PRNGKey(0)

    def run_case(idx, B, C, H, W, p, Cout, k_tile_cap):
        kcase = jax.random.fold_in(key, idx)
        kx, kp = jax.random.split(kcase)
        x = jax.random.normal(kx, (B, C, H, W), dtype=jnp.float32)
        weight, bias = init_patch_conv_params(kp, C, Cout, p)

        out = _forward_with_fallback(x, weight, bias, p, k_tile_cap)
        ref = _reference_forward(x, weight, bias, patch_size=p)

        if (H % p != 0) or (W % p != 0):
            Hp, Wp = H + (p - H % p), W + (p - W % p)
        else:
            Hp, Wp = H, W
        assert out.shape == (B, Cout, Hp // p, Wp // p), out.shape
        assert jnp.allclose(out, ref, atol=1e-4, rtol=1e-4), f"mismatch case {idx}"

    # Case 1: requested small shapes -> scratch-free single-K kernel path.
    run_case(0, 2, 4, 16, 16, 2, 8, 2048)
    # Case 2: forces the K-grid-tiled accumulator path (K=256 > cap=128, tk=128)
    #         and a non-multiple-of-128 spatial extent (Ho*Wo = 35).
    run_case(1, 2, 64, 10, 14, 2, 8, 128)
    # Case 3: non-divisible spatial dims exercise the module's padding rule.
    run_case(2, 2, 4, 15, 15, 2, 8, 2048)

    print("KERNEL_OK")
</pallas_src>

<mosaic_0001>
module attributes {stable_mosaic.version = 11 : i64} {
  func.func @_gemm_bias_kernel(%arg0: i32, %arg1: i32, %arg2: i32, %arg3: memref<1x16x64xf32, #tpu.memory_space<vmem>>, %arg4: memref<8x16xf32, #tpu.memory_space<vmem>>, %arg5: memref<8x1xf32, #tpu.memory_space<vmem>>, %arg6: memref<1x8x64xf32, #tpu.memory_space<vmem>>) attributes {dimension_semantics = [#tpu.dimension_semantics<parallel>, #tpu.dimension_semantics<parallel>, #tpu.dimension_semantics<parallel>], iteration_bounds = array<i64: 2, 1, 1>, scalar_prefetch = 0 : i64, scratch_operands = 0 : i64, tpu.core_type = #tpu.core_type<tc>, window_params = [{transform_indices = @transform_0, window_bounds = array<i64: 1, 16, 64>}, {transform_indices = @transform_1, window_bounds = array<i64: 8, 16>}, {transform_indices = @transform_2, window_bounds = array<i64: 8, 1>}, {transform_indices = @transform_3, window_bounds = array<i64: 1, 8, 64>}]} {
    %c0 = arith.constant 0 : index
    %c0_0 = arith.constant 0 : index
    %0 = vector.load %arg4[%c0, %c0_0] : memref<8x16xf32, #tpu.memory_space<vmem>>, vector<8x16xf32>
    %c0_1 = arith.constant 0 : index
    %c0_2 = arith.constant 0 : index
    %c0_3 = arith.constant 0 : index
    %1 = vector.load %arg3[%c0_1, %c0_2, %c0_3] : memref<1x16x64xf32, #tpu.memory_space<vmem>>, vector<1x16x64xf32>
    %2 = vector.shape_cast %1 : vector<1x16x64xf32> to vector<16x64xf32>
    %cst = arith.constant dense<0.000000e+00> : vector<8x64xf32>
    %3 = tpu.matmul %0, %2, %cst {dimension_numbers = #tpu.dot_dimension_numbers<[1], [0], [0], [1], [0, 0, 1, 1], [], []>} : vector<8x16xf32>, vector<16x64xf32>, vector<8x64xf32> -> vector<8x64xf32>
    %c0_4 = arith.constant 0 : index
    %c0_5 = arith.constant 0 : index
    %4 = vector.load %arg5[%c0_4, %c0_5] : memref<8x1xf32, #tpu.memory_space<vmem>>, vector<8x1xf32>
    %5 = vector.broadcast %4 : vector<8x1xf32> to vector<8x64xf32>
    %6 = arith.addf %3, %5 : vector<8x64xf32>
    %c0_6 = arith.constant 0 : index
    %c0_7 = arith.constant 0 : index
    %c0_8 = arith.constant 0 : index
    %7 = vector.load %arg6[%c0_6, %c0_7, %c0_8] : memref<1x8x64xf32, #tpu.memory_space<vmem>>, vector<1x8x64xf32>
    %8 = vector.shape_cast %7 : vector<1x8x64xf32> to vector<8x64xf32>
    %9 = vector.shape_cast %6 : vector<8x64xf32> to vector<1x8x64xf32>
    tpu.vector_store %arg6[%c0_6, %c0_7, %c0_8], %9 {strides = array<i32>} : memref<1x8x64xf32, #tpu.memory_space<vmem>>, vector<1x8x64xf32>,
    return
  }
  func.func @transform_0(%arg0: i32, %arg1: i32, %arg2: i32) -> (i32, i32, i32) {
    %c0_i32 = arith.constant 0 : i32
    %c0_i32_0 = arith.constant 0 : i32
    return %arg0, %c0_i32, %arg1 : i32, i32, i32
  }
  func.func @transform_1(%arg0: i32, %arg1: i32, %arg2: i32) -> (i32, i32) {
    %c0_i32 = arith.constant 0 : i32
    %c0_i32_0 = arith.constant 0 : i32
    return %arg2, %c0_i32 : i32, i32
  }
  func.func @transform_2(%arg0: i32, %arg1: i32, %arg2: i32) -> (i32, i32) {
    %c0_i32 = arith.constant 0 : i32
    %c0_i32_0 = arith.constant 0 : i32
    return %arg2, %c0_i32 : i32, i32
  }
  func.func @transform_3(%arg0: i32, %arg1: i32, %arg2: i32) -> (i32, i32, i32) {
    %c0_i32 = arith.constant 0 : i32
    return %arg0, %arg2, %arg1 : i32, i32, i32
  }
}

module attributes {stable_mosaic.version = 11 : i64} {
  func.func @_gemm_bias_kernel(%arg0: i32, %arg1: i32, %arg2: i32, %arg3: memref<1x16x64xf32, #tpu.memory_space<vmem>>, %arg4: memref<8x16xf32, #tpu.memory_space<vmem>>, %arg5: memref<8x1xf32, #tpu.memory_space<vmem>>, %arg6: memref<1x8x64xf32, #tpu.memory_space<vmem>>) attributes {dimension_semantics = [#tpu.dimension_semantics<parallel>, #tpu.dimension_semantics<parallel>, #tpu.dimension_semantics<parallel>], iteration_bounds = array<i64: 2, 1, 1>, scalar_prefetch = 0 : i64, scratch_operands = 0 : i64, tpu.core_type = #tpu.core_type<tc>, window_params = [{transform_indices = @transform_0, window_bounds = array<i64: 1, 16, 64>}, {transform_indices = @transform_1, window_bounds = array<i64: 8, 16>}, {transform_indices = @transform_2, window_bounds = array<i64: 8, 1>}, {transform_indices = @transform_3, window_bounds = array<i64: 1, 8, 64>}]} {
    %c0 = arith.constant 0 : index
    %c0_0 = arith.constant 0 : index
    %0 = vector.load %arg4[%c0, %c0_0] : memref<8x16xf32, #tpu.memory_space<vmem>>, vector<8x16xf32>
    %c0_1 = arith.constant 0 : index
    %c0_2 = arith.constant 0 : index
    %c0_3 = arith.constant 0 : index
    %1 = vector.load %arg3[%c0_1, %c0_2, %c0_3] : memref<1x16x64xf32, #tpu.memory_space<vmem>>, vector<1x16x64xf32>
    %2 = vector.shape_cast %1 : vector<1x16x64xf32> to vector<16x64xf32>
    %cst = arith.constant dense<0.000000e+00> : vector<8x64xf32>
    %3 = tpu.matmul %0, %2, %cst {dimension_numbers = #tpu.dot_dimension_numbers<[1], [0], [0], [1], [0, 0, 1, 1], [], []>} : vector<8x16xf32>, vector<16x64xf32>, vector<8x64xf32> -> vector<8x64xf32>
    %c0_4 = arith.constant 0 : index
    %c0_5 = arith.constant 0 : index
    %4 = vector.load %arg5[%c0_4, %c0_5] : memref<8x1xf32, #tpu.memory_space<vmem>>, vector<8x1xf32>
    %5 = vector.broadcast %4 : vector<8x1xf32> to vector<8x64xf32>
    %6 = arith.addf %3, %5 : vector<8x64xf32>
    %c0_6 = arith.constant 0 : index
    %c0_7 = arith.constant 0 : index
    %c0_8 = arith.constant 0 : index
    %7 = vector.load %arg6[%c0_6, %c0_7, %c0_8] : memref<1x8x64xf32, #tpu.memory_space<vmem>>, vector<1x8x64xf32>
    %8 = vector.shape_cast %7 : vector<1x8x64xf32> to vector<8x64xf32>
    %9 = vector.shape_cast %6 : vector<8x64xf32> to vector<1x8x64xf32>
    tpu.vector_store %arg6[%c0_6, %c0_7, %c0_8], %9 {strides = array<i32>} : memref<1x8x64xf32, #tpu.memory_space<vmem>>, vector<1x8x64xf32>,
    return
  }
  func.func @transform_0(%arg0: i32, %arg1: i32, %arg2: i32) -> (i32, i32, i32) {
    %c0_i32 = arith.constant 0 : i32
    %c0_i32_0 = arith.constant 0 : i32
    return %arg0, %c0_i32, %arg1 : i32, i32, i32
  }
  func.func @transform_1(%arg0: i32, %arg1: i32, %arg2: i32) -> (i32, i32) {
    %c0_i32 = arith.constant 0 : i32
    %c0_i32_0 = arith.constant 0 : i32
    return %arg2, %c0_i32 : i32, i32
  }
  func.func @transform_2(%arg0: i32, %arg1: i32, %arg2: i32) -> (i32, i32) {
    %c0_i32 = arith.constant 0 : i32
    %c0_i32_0 = arith.constant 0 : i32
    return %arg2, %c0_i32 : i32, i32
  }
  func.func @transform_3(%arg0: i32, %arg1: i32, %arg2: i32) -> (i32, i32, i32) {
    %c0_i32 = arith.constant 0 : i32
    return %arg0, %arg2, %arg1 : i32, i32, i32
  }
}

</mosaic_0001>

<llo_original>
// kernel: patch_conv_forward.1
$region0: #{patch_conv_forward.1}
  #allocation0 [shape = 'u32[]', space=smem, size = 0x4, offset = 0x4, fixed_abs, tag = 'smem constant byte address 0x4 - core index']
  #allocation1 [shape = 'u32[144,128]{1,0:T(1,128)}', space=vmem, size = 0x12000, scoped, tag = 'internal scratch']
  %s0 = inlined_call_operand.vmem [shape: f32[2,16,64], index: 0, kind: input, shape index: {}]
  %s1 = inlined_call_operand.vmem [shape: f32[8,16], index: 1, kind: input, shape index: {}]
  %s2 = inlined_call_operand.vmem [shape: f32[8,1], index: 2, kind: input, shape index: {}]
  %s3 = inlined_call_operand.vmem [shape: f32[2,8,64], index: 3, kind: output, shape index: {}]
  %s4 = sld [smem:[#allocation0]]
  $region45: #{patch_conv_forward.1} parent=0
    _
  %s6 = ssub.s32 1, %s4
  %s7 = scalar_select 0, %s6, %s4
  loop: start=0, step=1, limit=4
  $region2: #{patch_conv_forward.1} parent=0 // loop_pre_header
    _
  $region3: #{patch_conv_forward.1} parent=0 // loop_header
    %s9 = sphi 0, %s13
    %p10 = scmp.ge.s32.totalorder %s9, 4
    %s16 = sphi 0, %s35
    %s17 = sphi 0, %s31
    %s18 = sphi 0, %s27
    %s19 = sphi 0, %s16
    %s20 = sphi 0, %s17
    %s21 = sphi 0, %s18
    %s22 = sphi 0, %s19
    %s23 = sphi 0, %s20
    %s24 = sphi 0, %s21
    %s40 = sphi 0, %s42
    %s43 = sphi 0, %s40
    %s44 = sphi 0, %s43
    %s60 = sphi 0, %s44
    %s66 = sphi 0, %s68
    %s69 = sphi 0, %s66
    %s70 = sphi 0, %s69
    %s86 = sphi 0, %s70
    %s92 = sphi 0, %s94
    %s95 = sphi 0, %s92
    %s96 = sphi 0, %s95
    %s112 = sphi 0, %s96
    %s122 = sphi 0, %s124
    %s125 = sphi 0, %s122
    %s126 = sphi 0, %s125
    %s142 = sphi 0, %s126
  $region4: #{patch_conv_forward.1} parent=0 // loop_header_branch
    %12 = sbr.rel (%p10) target = $region8
  $region5: #{patch_conv_forward.1} parent=0 // loop_body
    %s14 = ssub.s32 %s9, 1
    %s15 = ssub.s32 %s9, 2
    %s25 = sadd.s32 1, %s18
    %p26 = scmp.ge.s32.totalorder %s25, 1
    %s27 = scalar_select %p26, 0, %s25
    %s28 = sadd.s32 1, %s17
    %s29 = scalar_select %p26, %s28, %s17
    %p30 = scmp.ge.s32.totalorder %s29, 1
    %s31 = scalar_select %p30, 0, %s29
    %s32 = sadd.s32 1, %s16
    %s33 = scalar_select %p30, %s32, %s16
    %p34 = scmp.ge.s32.totalorder %s33, 2
    %s35 = scalar_select %p34, 0, %s33
    %s36 = ssub.s32 %s16, %s35
    %s37 = ssub.s32 %s17, %s31
    %s38 = sor.u32 %s36, %s37
    %p39 = scmp.eq.s32.totalorder %s38, 0
    %s41 = sadd.s32 %s40, 1
    %s42 = scalar_select %p39, %s40, %s41
    %p45 = pneg %p39
    %p46 = scmp.eq.s32.totalorder %s9, 1
    %p47 = por %p45, %p46
    %p48 = scmp.ne.s32.totalorder %s40, %s43
    %p49 = scmp.eq.s32.totalorder %s9, 0
    %p50 = por %p48, %p49
    %p51 = scmp.ne.s32.totalorder %s40, %s43
    %p52 = scmp.eq.s32.totalorder %s14, 1
    %p53 = por %p51, %p52
    %p54 = scmp.ne.s32.totalorder %s43, %s44
    %p55 = scmp.eq.s32.totalorder %s14, 0
    %p56 = por %p54, %p55
    %p57 = scmp.ne.s32.totalorder %s43, %s44
    %p58 = scmp.eq.s32.totalorder %s15, 1
    %p59 = por %p57, %p58
    %p61 = scmp.ne.s32.totalorder %s44, %s60
    %p62 = scmp.eq.s32.totalorder %s15, 0
    %p63 = por %p61, %p62
    %s64 = ssub.s32 %s18, %s27
    %p65 = scmp.eq.s32.totalorder %s64, 0
    %s67 = sadd.s32 %s66, 1
    %s68 = scalar_select %p65, %s66, %s67
    %p71 = pneg %p65
    %p72 = scmp.eq.s32.totalorder %s9, 1
    %p73 = por %p71, %p72
    %p74 = scmp.ne.s32.totalorder %s66, %s69
    %p75 = scmp.eq.s32.totalorder %s9, 0
    %p76 = por %p74, %p75
    %p77 = scmp.ne.s32.totalorder %s66, %s69
    %p78 = scmp.eq.s32.totalorder %s14, 1
    %p79 = por %p77, %p78
    %p80 = scmp.ne.s32.totalorder %s69, %s70
    %p81 = scmp.eq.s32.totalorder %s14, 0
    %p82 = por %p80, %p81
    %p83 = scmp.ne.s32.totalorder %s69, %s70
    %p84 = scmp.eq.s32.totalorder %s15, 1
    %p85 = por %p83, %p84
    %p87 = scmp.ne.s32.totalorder %s70, %s86
    %p88 = scmp.eq.s32.totalorder %s15, 0
    %p89 = por %p87, %p88
    %s90 = ssub.s32 %s18, %s27
    %p91 = scmp.eq.s32.totalorder %s90, 0
    %s93 = sadd.s32 %s92, 1
    %s94 = scalar_select %p91, %s92, %s93
    %p97 = pneg %p91
    %p98 = scmp.eq.s32.totalorder %s9, 1
    %p99 = por %p97, %p98
    %p100 = scmp.ne.s32.totalorder %s92, %s95
    %p101 = scmp.eq.s32.totalorder %s9, 0
    %p102 = por %p100, %p101
    %p103 = scmp.ne.s32.totalorder %s92, %s95
    %p104 = scmp.eq.s32.totalorder %s14, 1
    %p105 = por %p103, %p104
    %p106 = scmp.ne.s32.totalorder %s95, %s96
    %p107 = scmp.eq.s32.totalorder %s14, 0
    %p108 = por %p106, %p107
    %p109 = scmp.ne.s32.totalorder %s95, %s96
    %p110 = scmp.eq.s32.totalorder %s15, 1
    %p111 = por %p109, %p110
    %p113 = scmp.ne.s32.totalorder %s96, %s112
    %p114 = scmp.eq.s32.totalorder %s15, 0
    %p115 = por %p113, %p114
    %s116 = ssub.s32 %s16, %s35
    %s117 = ssub.s32 %s18, %s27
    %s118 = sor.u32 %s116, %s117
    %s119 = ssub.s32 %s17, %s31
    %s120 = sor.u32 %s118, %s119
    %p121 = scmp.eq.s32.totalorder %s120, 0
    %s123 = sadd.s32 %s122, 1
    %s124 = scalar_select %p121, %s122, %s123
    %p127 = pneg %p121
    %p128 = scmp.eq.s32.totalorder %s9, 1
    %p129 = por %p127, %p128
    %p130 = scmp.ne.s32.totalorder %s122, %s125
    %p131 = scmp.eq.s32.totalorder %s9, 0
    %p132 = por %p130, %p131
    %p133 = scmp.ne.s32.totalorder %s122, %s125
    %p134 = scmp.eq.s32.totalorder %s14, 1
    %p135 = por %p133, %p134
    %p136 = scmp.ne.s32.totalorder %s125, %s126
    %p137 = scmp.eq.s32.totalorder %s14, 0
    %p138 = por %p136, %p137
    %p139 = scmp.ne.s32.totalorder %s125, %s126
    %p140 = scmp.eq.s32.totalorder %s15, 1
    %p141 = por %p139, %p140
    %p143 = scmp.ne.s32.totalorder %s126, %s142
    %p144 = scmp.eq.s32.totalorder %s15, 0
    %p145 = por %p143, %p144
    %p146 = scmp.le.s32.totalorder 1, %s9
    %p147 = scmp.lt.s32.totalorder %s9, 3
    %p148 = pnand %p146, %p147
    %p149 = pneg %p148
    // Predicated region
    $region9: #{patch_conv_forward.1} parent=5 // pred_check
      _
    $region10: #{patch_conv_forward.1} parent=5 // pred_check_branch
      %151 = sbr.rel (%p148) target = $region12
    $region11: #{patch_conv_forward.1} parent=5 // pred_region
      %s152 = ssub.s32 %s9, 1
      // Predicated region
      $region13: #{patch_conv_forward.1} parent=11 // pred_check
        %p153 = pneg %p82
      $region14: #{patch_conv_forward.1} parent=11 // pred_check_branch
        %155 = sbr.rel (%p153) target = $region16
      $region15: #{patch_conv_forward.1} parent=11 // pred_region
        %p156 = scmp.lt.s32.totalorder %s21, 0
        %s157 = scalar_select %p156, %s21, 0
        %s158 = smul.addr %s157, 8
        %s159 = scalar_lea.vmem %s1, %s158
      $region16: #{patch_conv_forward.1} parent=11 // pred_fallthru
        _
      // Predicated region
      $region17: #{patch_conv_forward.1} parent=11 // pred_check
        %p160 = pneg %p108
      $region18: #{patch_conv_forward.1} parent=11 // pred_check_branch
        %162 = sbr.rel (%p160) target = $region20
      $region19: #{patch_conv_forward.1} parent=11 // pred_region
        %p163 = scmp.lt.s32.totalorder %s21, 0
        %s164 = scalar_select %p163, %s21, 0
        %s165 = smul.addr %s164, 8
        %s166 = scalar_lea.vmem %s2, %s165
      $region20: #{patch_conv_forward.1} parent=11 // pred_fallthru
        _
    $region12: #{patch_conv_forward.1} parent=5 // pred_fallthru
      _
    %p167 = scmp.lt.s32.totalorder %s9, 2
    // Predicated region
    $region21: #{patch_conv_forward.1} parent=5 // pred_check
      %p168 = pneg %p167
    $region22: #{patch_conv_forward.1} parent=5 // pred_check_branch
      %170 = sbr.rel (%p168) target = $region24
    $region23: #{patch_conv_forward.1} parent=5 // pred_region
      // Predicated region
      $region25: #{patch_conv_forward.1} parent=23 // pred_check
        %p171 = pneg %p50
      $region26: #{patch_conv_forward.1} parent=23 // pred_check_branch
        %173 = sbr.rel (%p171) target = $region28
      $region27: #{patch_conv_forward.1} parent=23 // pred_region
        %p174 = scmp.lt.s32.totalorder %s16, 1
        %s175 = scalar_select %p174, %s16, 1
        %p176 = scmp.lt.s32.totalorder %s17, 0
        %s177 = scalar_select %p176, %s17, 0
        %s178 = smul.addr %s175, 2
        %s179 = sadd.s32 %s177, %s178
        %s180 = smul.addr %s179, 8
        %s181 = scalar_lea.vmem %s0, %s180
      $region28: #{patch_conv_forward.1} parent=23 // pred_fallthru
        _
    $region24: #{patch_conv_forward.1} parent=5 // pred_fallthru
      _
    %p182 = scmp.le.s32.totalorder 1, %s9
    %p183 = scmp.lt.s32.totalorder %s9, 3
    %p184 = pnand %p182, %p183
    %p185 = pneg %p184
    // Predicated region
    $region29: #{patch_conv_forward.1} parent=5 // pred_check
      _
    $region30: #{patch_conv_forward.1} parent=5 // pred_check_branch
      %187 = sbr.rel (%p184) target = $region32
    $region31: #{patch_conv_forward.1} parent=5 // pred_region
      %s188 = ssub.s32 %s9, 1
      %p189 = scmp.lt.s32.totalorder %s19, 1
      %s190 = scalar_select %p189, %s19, 1
      %p191 = scmp.lt.s32.totalorder %s20, 0
      %s192 = scalar_select %p191, %s20, 0
      %s193 = smul.addr %s190, 2
      %s194 = sadd.s32 %s192, %s193
      %s195 = smul.addr %s194, 8
      %s196 = scalar_lea.vmem %s0, %s195
      %p197 = pneg %p56
      %p198 = pneg %p53
      %p199 = scmp.lt.s32.totalorder %s21, 0
      %s200 = scalar_select %p199, %s21, 0
      %s201 = smul.addr %s200, 8
      %s202 = scalar_lea.vmem %s1, %s201
      %p203 = pneg %p82
      %p204 = pneg %p79
      %p205 = scmp.lt.s32.totalorder %s21, 0
      %s206 = scalar_select %p205, %s21, 0
      %s207 = smul.addr %s206, 8
      %s208 = scalar_lea.vmem %s2, %s207
      %p209 = pneg %p108
      %p210 = pneg %p105
      %p211 = pneg %p138
      %p212 = pneg %p135
      %p213 = scmp.lt.s32.totalorder %s19, 1
      %s214 = scalar_select %p213, %s19, 1
      %p215 = scmp.lt.s32.totalorder %s21, 0
      %s216 = scalar_select %p215, %s21, 0
      %p217 = scmp.lt.s32.totalorder %s20, 0
      %s218 = scalar_select %p217, %s20, 0
      %s219 = sadd.s32 %s218, %s216
      %s220 = sadd.s32 %s219, %s214
      %s221 = smul.addr %s220, 8
      %s222 = scalar_lea.vmem %s3, %s221
      %p223 = scmp.lt.s32.totalorder %s19, 1
      %s224 = scalar_select %p223, %s19, 1
      %p225 = scmp.lt.s32.totalorder %s20, 0
      %s226 = scalar_select %p225, %s20, 0
      %s227 = smul.addr %s224, 2
      %s228 = sadd.s32 %s226, %s227
      %s229 = smul.addr %s228, 8
      %s230 = scalar_lea.vmem %s0, %s229
      %p231 = scmp.lt.s32.totalorder %s21, 0
      %s232 = scalar_select %p231, %s21, 0
      %s233 = smul.addr %s232, 8
      %s234 = scalar_lea.vmem %s1, %s233
      %p235 = scmp.lt.s32.totalorder %s21, 0
      %s236 = scalar_select %p235, %s21, 0
      %s237 = smul.addr %s236, 8
      %s238 = scalar_lea.vmem %s2, %s237
      %p239 = scmp.lt.s32.totalorder %s19, 1
      %s240 = scalar_select %p239, %s19, 1
      %p241 = scmp.lt.s32.totalorder %s21, 0
      %s242 = scalar_select %p241, %s21, 0
      %p243 = scmp.lt.s32.totalorder %s20, 0
      %s244 = scalar_select %p243, %s20, 0
      %s245 = sadd.s32 %s244, %s242
      %s246 = sadd.s32 %s245, %s240
      %s247 = smul.addr %s246, 8
      %s248 = scalar_lea.vmem %s3, %s247
      %v249 = vld [vmem:[%s234] sm:$0xff]
      %v250 = vld [vmem:[%s230] sm:$0xff]
      %v251 = vld [vmem:[%s230 + $0x8] sm:$0xff]
      %v252 = vld [vmem:[%s238] sm:$0xff]
      %254 = vset.pattern.permute.xlu0 0
      %255 = vperm.xlu0 %254, %v252
      %v256 = vpop.permute.xlu0 %255
      %vm258 = vcmask 130048
      %v260 = vsel %vm258, %v249, 0
      %262 = vmatprep.subr.mxu0 0.0
      %263 = vmatpush1.msra.mxu0 %v250
      %264 = vmatprep.subr.mxu0 0.0
      %265 = vmatpush1.msra.mxu0 %v251
      %266 = vmatprep.subr.mxu0 0.0
      %267 = vmatpush1.msra.mxu0 0.0
      %268 = vmatprep.subr.mxu0 0.0
      %269 = vmatpush1.msra.mxu0 0.0
      %270 = vmatprep.subr.mxu0 0.0
      %271 = vmatpush1.msra.mxu0 0.0
      %272 = vmatprep.subr.mxu0 0.0
      %273 = vmatpush1.msra.mxu0 0.0
      %274 = vmatprep.subr.mxu0 0.0
      %275 = vmatpush1.msra.mxu0 0.0
      %276 = vmatprep.subr.mxu0 0.0
      %277 = vmatpush1.msra.mxu0 0.0
      %278 = vmatprep.subr.mxu0 0.0
      %279 = vmatpush1.msra.mxu0 0.0
      %280 = vmatprep.subr.mxu0 0.0
      %281 = vmatpush1.msra.mxu0 0.0
      %282 = vmatprep.subr.mxu0 0.0
      %283 = vmatpush1.msra.mxu0 0.0
      %284 = vmatprep.subr.mxu0 0.0
      %285 = vmatpush1.msra.mxu0 0.0
      %286 = vmatprep.subr.mxu0 0.0
      %287 = vmatpush1.msra.mxu0 0.0
      %288 = vmatprep.subr.mxu0 0.0
      %289 = vmatpush1.msra.mxu0 0.0
      %290 = vmatprep.subr.mxu0 0.0
      %291 = vmatpush1.msra.mxu0 0.0
      %292 = vmatprep.subr.mxu0 0.0
      %293 = vmatpush1.msra.mxu0 0.0
      %294 = vmatprep.subr.mxu0 0.0
      %295 = vmatpush1.msra.mxu0 0.0
      %296 = vmatprep.subr.mxu0 0.0
      %297 = vmatpush1.msra.mxu0 0.0
      %298 = vmatprep.subr.mxu0 0.0
      %299 = vmatpush1.msra.mxu0 0.0
      %300 = vmatprep.subr.mxu0 0.0
      %301 = vmatpush1.msra.mxu0 0.0
      %302 = vmatprep.subr.mxu0 0.0
      %303 = vmatpush1.msra.mxu0 0.0
      %304 = vmatprep.subr.mxu0 0.0
      %305 = vmatpush1.msra.mxu0 0.0
      %306 = vmatprep.subr.mxu0 0.0
      %307 = vmatpush1.msra.mxu0 0.0
      %308 = vmatprep.subr.mxu0 0.0
      %309 = vmatpush1.msra.mxu0 0.0
      %310 = vmatprep.subr.mxu0 0.0
      %311 = vmatpush1.msra.mxu0 0.0
      %312 = vmatprep.subr.mxu0 0.0
      %313 = vmatpush1.msra.mxu0 0.0
      %314 = vmatprep.subr.mxu0 0.0
      %315 = vmatpush1.msra.mxu0 0.0
      %316 = vmatprep.subr.mxu0 0.0
      %317 = vmatpush1.msra.mxu0 0.0
      %318 = vmatprep.subr.mxu0 0.0
      %319 = vmatpush1.msra.mxu0 0.0
      %320 = vmatprep.subr.mxu0 0.0
      %321 = vmatpush1.msra.mxu0 0.0
      %322 = vmatprep.subr.mxu0 0.0
      %323 = vmatpush1.msra.mxu0 0.0
      %324 = vmatprep.subr.mxu0 0.0
      %325 = vmatpush1.msra.mxu0 0.0
      %326 = vmatprep.mubr.f32.mxu0 0.0
      %327 = vmatmul.mubr.f32.gmra.mrb[0].mxu0 %v260
      %v328 = vpop.f32.mrb[0].mxu0
      %v329 = vadd.f32 %v256, %v328
      %v330 = vpop.f32.mrb[0].mxu0
      %331 = vdwg.mxu0
      %vm332 = vcmask 523264
      %333 = vst.msk [vmem:[%s248] sm:$0xff] %vm332, %v329
      %p334 = scmp.lt.s32.totalorder %s19, 1
      %s335 = scalar_select %p334, %s19, 1
      %p336 = scmp.lt.s32.totalorder %s21, 0
      %s337 = scalar_select %p336, %s21, 0
      %p338 = scmp.lt.s32.totalorder %s20, 0
      %s339 = scalar_select %p338, %s20, 0
      %s340 = sadd.s32 %s339, %s337
      %s341 = sadd.s32 %s340, %s335
      %s342 = smul.addr %s341, 8
      %s343 = scalar_lea.vmem %s3, %s342
      // Predicated region
      $region33: #{patch_conv_forward.1} parent=31 // pred_check
        %p344 = pneg %p135
      $region34: #{patch_conv_forward.1} parent=31 // pred_check_branch
        %346 = sbr.rel (%p344) target = $region36
      $region35: #{patch_conv_forward.1} parent=31 // pred_region
        _
      $region36: #{patch_conv_forward.1} parent=31 // pred_fallthru
        _
    $region32: #{patch_conv_forward.1} parent=5 // pred_fallthru
      _
    %p347 = scmp.le.s32.totalorder 2, %s9
    // Predicated region
    $region37: #{patch_conv_forward.1} parent=5 // pred_check
      %p348 = pneg %p347
    $region38: #{patch_conv_forward.1} parent=5 // pred_check_branch
      %350 = sbr.rel (%p348) target = $region40
    $region39: #{patch_conv_forward.1} parent=5 // pred_region
      %s351 = ssub.s32 %s9, 2
      // Predicated region
      $region41: #{patch_conv_forward.1} parent=39 // pred_check
        %p352 = pneg %p141
      $region42: #{patch_conv_forward.1} parent=39 // pred_check_branch
        %354 = sbr.rel (%p352) target = $region44
      $region43: #{patch_conv_forward.1} parent=39 // pred_region
        %p355 = scmp.lt.s32.totalorder %s22, 1
        %s356 = scalar_select %p355, %s22, 1
        %p357 = scmp.lt.s32.totalorder %s24, 0
        %s358 = scalar_select %p357, %s24, 0
        %p359 = scmp.lt.s32.totalorder %s23, 0
        %s360 = scalar_select %p359, %s23, 0
        %s361 = sadd.s32 %s360, %s358
        %s362 = sadd.s32 %s361, %s356
        %s363 = smul.addr %s362, 8
        %s364 = scalar_lea.vmem %s3, %s363
      $region44: #{patch_conv_forward.1} parent=39 // pred_fallthru
        _
    $region40: #{patch_conv_forward.1} parent=5 // pred_fallthru
      _
  $region6: #{patch_conv_forward.1} parent=0 // loop_footer
    %s13 = sadd.s32 1, %s9
  $region7: #{patch_conv_forward.1} parent=0 // loop_footer_branch
    %8 = sbr.rel target = $region3
  $region8: #{patch_conv_forward.1} parent=0 // loop_exit
    _

// kernel: patch_conv_forward.1
$region0: #{patch_conv_forward.1}
  #allocation0 [shape = 'u32[]', space=smem, size = 0x4, offset = 0x4, fixed_abs, tag = 'smem constant byte address 0x4 - core index']
  #allocation1 [shape = 'u32[144,128]{1,0:T(1,128)}', space=vmem, size = 0x12000, scoped, tag = 'internal scratch']
  %s0 = inlined_call_operand.vmem [shape: f32[2,16,64], index: 0, kind: input, shape index: {}]
  %s1 = inlined_call_operand.vmem [shape: f32[8,16], index: 1, kind: input, shape index: {}]
  %s2 = inlined_call_operand.vmem [shape: f32[8,1], index: 2, kind: input, shape index: {}]
  %s3 = inlined_call_operand.vmem [shape: f32[2,8,64], index: 3, kind: output, shape index: {}]
  %s4 = sld [smem:[#allocation0]]
  $region45: #{patch_conv_forward.1} parent=0
    _
  %s6 = ssub.s32 1, %s4
  %s7 = scalar_select 0, %s6, %s4
  loop: start=0, step=1, limit=4
  $region2: #{patch_conv_forward.1} parent=0 // loop_pre_header
    _
  $region3: #{patch_conv_forward.1} parent=0 // loop_header
    %s9 = sphi 0, %s13
    %p10 = scmp.ge.s32.totalorder %s9, 4
    %s16 = sphi 0, %s35
    %s17 = sphi 0, %s31
    %s18 = sphi 0, %s27
    %s19 = sphi 0, %s16
    %s20 = sphi 0, %s17
    %s21 = sphi 0, %s18
    %s22 = sphi 0, %s19
    %s23 = sphi 0, %s20
    %s24 = sphi 0, %s21
    %s40 = sphi 0, %s42
    %s43 = sphi 0, %s40
    %s44 = sphi 0, %s43
    %s60 = sphi 0, %s44
    %s66 = sphi 0, %s68
    %s69 = sphi 0, %s66
    %s70 = sphi 0, %s69
    %s86 = sphi 0, %s70
    %s92 = sphi 0, %s94
    %s95 = sphi 0, %s92
    %s96 = sphi 0, %s95
    %s112 = sphi 0, %s96
    %s122 = sphi 0, %s124
    %s125 = sphi 0, %s122
    %s126 = sphi 0, %s125
    %s142 = sphi 0, %s126
  $region4: #{patch_conv_forward.1} parent=0 // loop_header_branch
    %12 = sbr.rel (%p10) target = $region8
  $region5: #{patch_conv_forward.1} parent=0 // loop_body
    %s14 = ssub.s32 %s9, 1
    %s15 = ssub.s32 %s9, 2
    %s25 = sadd.s32 1, %s18
    %p26 = scmp.ge.s32.totalorder %s25, 1
    %s27 = scalar_select %p26, 0, %s25
    %s28 = sadd.s32 1, %s17
    %s29 = scalar_select %p26, %s28, %s17
    %p30 = scmp.ge.s32.totalorder %s29, 1
    %s31 = scalar_select %p30, 0, %s29
    %s32 = sadd.s32 1, %s16
    %s33 = scalar_select %p30, %s32, %s16
    %p34 = scmp.ge.s32.totalorder %s33, 2
    %s35 = scalar_select %p34, 0, %s33
    %s36 = ssub.s32 %s16, %s35
    %s37 = ssub.s32 %s17, %s31
    %s38 = sor.u32 %s36, %s37
    %p39 = scmp.eq.s32.totalorder %s38, 0
    %s41 = sadd.s32 %s40, 1
    %s42 = scalar_select %p39, %s40, %s41
    %p45 = pneg %p39
    %p46 = scmp.eq.s32.totalorder %s9, 1
    %p47 = por %p45, %p46
    %p48 = scmp.ne.s32.totalorder %s40, %s43
    %p49 = scmp.eq.s32.totalorder %s9, 0
    %p50 = por %p48, %p49
    %p51 = scmp.ne.s32.totalorder %s40, %s43
    %p52 = scmp.eq.s32.totalorder %s14, 1
    %p53 = por %p51, %p52
    %p54 = scmp.ne.s32.totalorder %s43, %s44
    %p55 = scmp.eq.s32.totalorder %s14, 0
    %p56 = por %p54, %p55
    %p57 = scmp.ne.s32.totalorder %s43, %s44
    %p58 = scmp.eq.s32.totalorder %s15, 1
    %p59 = por %p57, %p58
    %p61 = scmp.ne.s32.totalorder %s44, %s60
    %p62 = scmp.eq.s32.totalorder %s15, 0
    %p63 = por %p61, %p62
    %s64 = ssub.s32 %s18, %s27
    %p65 = scmp.eq.s32.totalorder %s64, 0
    %s67 = sadd.s32 %s66, 1
    %s68 = scalar_select %p65, %s66, %s67
    %p71 = pneg %p65
    %p72 = scmp.eq.s32.totalorder %s9, 1
    %p73 = por %p71, %p72
    %p74 = scmp.ne.s32.totalorder %s66, %s69
    %p75 = scmp.eq.s32.totalorder %s9, 0
    %p76 = por %p74, %p75
    %p77 = scmp.ne.s32.totalorder %s66, %s69
    %p78 = scmp.eq.s32.totalorder %s14, 1
    %p79 = por %p77, %p78
    %p80 = scmp.ne.s32.totalorder %s69, %s70
    %p81 = scmp.eq.s32.totalorder %s14, 0
    %p82 = por %p80, %p81
    %p83 = scmp.ne.s32.totalorder %s69, %s70
    %p84 = scmp.eq.s32.totalorder %s15, 1
    %p85 = por %p83, %p84
    %p87 = scmp.ne.s32.totalorder %s70, %s86
    %p88 = scmp.eq.s32.totalorder %s15, 0
    %p89 = por %p87, %p88
    %s90 = ssub.s32 %s18, %s27
    %p91 = scmp.eq.s32.totalorder %s90, 0
    %s93 = sadd.s32 %s92, 1
    %s94 = scalar_select %p91, %s92, %s93
    %p97 = pneg %p91
    %p98 = scmp.eq.s32.totalorder %s9, 1
    %p99 = por %p97, %p98
    %p100 = scmp.ne.s32.totalorder %s92, %s95
    %p101 = scmp.eq.s32.totalorder %s9, 0
    %p102 = por %p100, %p101
    %p103 = scmp.ne.s32.totalorder %s92, %s95
    %p104 = scmp.eq.s32.totalorder %s14, 1
    %p105 = por %p103, %p104
    %p106 = scmp.ne.s32.totalorder %s95, %s96
    %p107 = scmp.eq.s32.totalorder %s14, 0
    %p108 = por %p106, %p107
    %p109 = scmp.ne.s32.totalorder %s95, %s96
    %p110 = scmp.eq.s32.totalorder %s15, 1
    %p111 = por %p109, %p110
    %p113 = scmp.ne.s32.totalorder %s96, %s112
    %p114 = scmp.eq.s32.totalorder %s15, 0
    %p115 = por %p113, %p114
    %s116 = ssub.s32 %s16, %s35
    %s117 = ssub.s32 %s18, %s27
    %s118 = sor.u32 %s116, %s117
    %s119 = ssub.s32 %s17, %s31
    %s120 = sor.u32 %s118, %s119
    %p121 = scmp.eq.s32.totalorder %s120, 0
    %s123 = sadd.s32 %s122, 1
    %s124 = scalar_select %p121, %s122, %s123
    %p127 = pneg %p121
    %p128 = scmp.eq.s32.totalorder %s9, 1
    %p129 = por %p127, %p128
    %p130 = scmp.ne.s32.totalorder %s122, %s125
    %p131 = scmp.eq.s32.totalorder %s9, 0
    %p132 = por %p130, %p131
    %p133 = scmp.ne.s32.totalorder %s122, %s125
    %p134 = scmp.eq.s32.totalorder %s14, 1
    %p135 = por %p133, %p134
    %p136 = scmp.ne.s32.totalorder %s125, %s126
    %p137 = scmp.eq.s32.totalorder %s14, 0
    %p138 = por %p136, %p137
    %p139 = scmp.ne.s32.totalorder %s125, %s126
    %p140 = scmp.eq.s32.totalorder %s15, 1
    %p141 = por %p139, %p140
    %p143 = scmp.ne.s32.totalorder %s126, %s142
    %p144 = scmp.eq.s32.totalorder %s15, 0
    %p145 = por %p143, %p144
    %p146 = scmp.le.s32.totalorder 1, %s9
    %p147 = scmp.lt.s32.totalorder %s9, 3
    %p148 = pnand %p146, %p147
    %p149 = pneg %p148
    // Predicated region
    $region9: #{patch_conv_forward.1} parent=5 // pred_check
      _
    $region10: #{patch_conv_forward.1} parent=5 // pred_check_branch
      %151 = sbr.rel (%p148) target = $region12
    $region11: #{patch_conv_forward.1} parent=5 // pred_region
      %s152 = ssub.s32 %s9, 1
      // Predicated region
      $region13: #{patch_conv_forward.1} parent=11 // pred_check
        %p153 = pneg %p82
      $region14: #{patch_conv_forward.1} parent=11 // pred_check_branch
        %155 = sbr.rel (%p153) target = $region16
      $region15: #{patch_conv_forward.1} parent=11 // pred_region
        %p156 = scmp.lt.s32.totalorder %s21, 0
        %s157 = scalar_select %p156, %s21, 0
        %s158 = smul.addr %s157, 8
        %s159 = scalar_lea.vmem %s1, %s158
      $region16: #{patch_conv_forward.1} parent=11 // pred_fallthru
        _
      // Predicated region
      $region17: #{patch_conv_forward.1} parent=11 // pred_check
        %p160 = pneg %p108
      $region18: #{patch_conv_forward.1} parent=11 // pred_check_branch
        %162 = sbr.rel (%p160) target = $region20
      $region19: #{patch_conv_forward.1} parent=11 // pred_region
        %p163 = scmp.lt.s32.totalorder %s21, 0
        %s164 = scalar_select %p163, %s21, 0
        %s165 = smul.addr %s164, 8
        %s166 = scalar_lea.vmem %s2, %s165
      $region20: #{patch_conv_forward.1} parent=11 // pred_fallthru
        _
    $region12: #{patch_conv_forward.1} parent=5 // pred_fallthru
      _
    %p167 = scmp.lt.s32.totalorder %s9, 2
    // Predicated region
    $region21: #{patch_conv_forward.1} parent=5 // pred_check
      %p168 = pneg %p167
    $region22: #{patch_conv_forward.1} parent=5 // pred_check_branch
      %170 = sbr.rel (%p168) target = $region24
    $region23: #{patch_conv_forward.1} parent=5 // pred_region
      // Predicated region
      $region25: #{patch_conv_forward.1} parent=23 // pred_check
        %p171 = pneg %p50
      $region26: #{patch_conv_forward.1} parent=23 // pred_check_branch
        %173 = sbr.rel (%p171) target = $region28
      $region27: #{patch_conv_forward.1} parent=23 // pred_region
        %p174 = scmp.lt.s32.totalorder %s16, 1
        %s175 = scalar_select %p174, %s16, 1
        %p176 = scmp.lt.s32.totalorder %s17, 0
        %s177 = scalar_select %p176, %s17, 0
        %s178 = smul.addr %s175, 2
        %s179 = sadd.s32 %s177, %s178
        %s180 = smul.addr %s179, 8
        %s181 = scalar_lea.vmem %s0, %s180
      $region28: #{patch_conv_forward.1} parent=23 // pred_fallthru
        _
    $region24: #{patch_conv_forward.1} parent=5 // pred_fallthru
      _
    %p182 = scmp.le.s32.totalorder 1, %s9
    %p183 = scmp.lt.s32.totalorder %s9, 3
    %p184 = pnand %p182, %p183
    %p185 = pneg %p184
    // Predicated region
    $region29: #{patch_conv_forward.1} parent=5 // pred_check
      _
    $region30: #{patch_conv_forward.1} parent=5 // pred_check_branch
      %187 = sbr.rel (%p184) target = $region32
    $region31: #{patch_conv_forward.1} parent=5 // pred_region
      %s188 = ssub.s32 %s9, 1
      %p189 = scmp.lt.s32.totalorder %s19, 1
      %s190 = scalar_select %p189, %s19, 1
      %p191 = scmp.lt.s32.totalorder %s20, 0
      %s192 = scalar_select %p191, %s20, 0
      %s193 = smul.addr %s190, 2
      %s194 = sadd.s32 %s192, %s193
      %s195 = smul.addr %s194, 8
      %s196 = scalar_lea.vmem %s0, %s195
      %p197 = pneg %p56
      %p198 = pneg %p53
      %p199 = scmp.lt.s32.totalorder %s21, 0
      %s200 = scalar_select %p199, %s21, 0
      %s201 = smul.addr %s200, 8
      %s202 = scalar_lea.vmem %s1, %s201
      %p203 = pneg %p82
      %p204 = pneg %p79
      %p205 = scmp.lt.s32.totalorder %s21, 0
      %s206 = scalar_select %p205, %s21, 0
      %s207 = smul.addr %s206, 8
      %s208 = scalar_lea.vmem %s2, %s207
      %p209 = pneg %p108
      %p210 = pneg %p105
      %p211 = pneg %p138
      %p212 = pneg %p135
      %p213 = scmp.lt.s32.totalorder %s19, 1
      %s214 = scalar_select %p213, %s19, 1
      %p215 = scmp.lt.s32.totalorder %s21, 0
      %s216 = scalar_select %p215, %s21, 0
      %p217 = scmp.lt.s32.totalorder %s20, 0
      %s218 = scalar_select %p217, %s20, 0
      %s219 = sadd.s32 %s218, %s216
      %s220 = sadd.s32 %s219, %s214
      %s221 = smul.addr %s220, 8
      %s222 = scalar_lea.vmem %s3, %s221
      %p223 = scmp.lt.s32.totalorder %s19, 1
      %s224 = scalar_select %p223, %s19, 1
      %p225 = scmp.lt.s32.totalorder %s20, 0
      %s226 = scalar_select %p225, %s20, 0
      %s227 = smul.addr %s224, 2
      %s228 = sadd.s32 %s226, %s227
      %s229 = smul.addr %s228, 8
      %s230 = scalar_lea.vmem %s0, %s229
      %p231 = scmp.lt.s32.totalorder %s21, 0
      %s232 = scalar_select %p231, %s21, 0
      %s233 = smul.addr %s232, 8
      %s234 = scalar_lea.vmem %s1, %s233
      %p235 = scmp.lt.s32.totalorder %s21, 0
      %s236 = scalar_select %p235, %s21, 0
      %s237 = smul.addr %s236, 8
      %s238 = scalar_lea.vmem %s2, %s237
      %p239 = scmp.lt.s32.totalorder %s19, 1
      %s240 = scalar_select %p239, %s19, 1
      %p241 = scmp.lt.s32.totalorder %s21, 0
      %s242 = scalar_select %p241, %s21, 0
      %p243 = scmp.lt.s32.totalorder %s20, 0
      %s244 = scalar_select %p243, %s20, 0
      %s245 = sadd.s32 %s244, %s242
      %s246 = sadd.s32 %s245, %s240
      %s247 = smul.addr %s246, 8
      %s248 = scalar_lea.vmem %s3, %s247
      %v249 = vld [vmem:[%s234] sm:$0xff]
      %v250 = vld [vmem:[%s230] sm:$0xff]
      %v251 = vld [vmem:[%s230 + $0x8] sm:$0xff]
      %v252 = vld [vmem:[%s238] sm:$0xff]
      %254 = vset.pattern.permute.xlu0 0
      %255 = vperm.xlu0 %254, %v252
      %v256 = vpop.permute.xlu0 %255
      %vm258 = vcmask 130048
      %v260 = vsel %vm258, %v249, 0
      %262 = vmatprep.subr.mxu0 0.0
      %263 = vmatpush1.msra.mxu0 %v250
      %264 = vmatprep.subr.mxu0 0.0
      %265 = vmatpush1.msra.mxu0 %v251
      %266 = vmatprep.subr.mxu0 0.0
      %267 = vmatpush1.msra.mxu0 0.0
      %268 = vmatprep.subr.mxu0 0.0
      %269 = vmatpush1.msra.mxu0 0.0
      %270 = vmatprep.subr.mxu0 0.0
      %271 = vmatpush1.msra.mxu0 0.0
      %272 = vmatprep.subr.mxu0 0.0
      %273 = vmatpush1.msra.mxu0 0.0
      %274 = vmatprep.subr.mxu0 0.0
      %275 = vmatpush1.msra.mxu0 0.0
      %276 = vmatprep.subr.mxu0 0.0
      %277 = vmatpush1.msra.mxu0 0.0
      %278 = vmatprep.subr.mxu0 0.0
      %279 = vmatpush1.msra.mxu0 0.0
      %280 = vmatprep.subr.mxu0 0.0
      %281 = vmatpush1.msra.mxu0 0.0
      %282 = vmatprep.subr.mxu0 0.0
      %283 = vmatpush1.msra.mxu0 0.0
      %284 = vmatprep.subr.mxu0 0.0
      %285 = vmatpush1.msra.mxu0 0.0
      %286 = vmatprep.subr.mxu0 0.0
      %287 = vmatpush1.msra.mxu0 0.0
      %288 = vmatprep.subr.mxu0 0.0
      %289 = vmatpush1.msra.mxu0 0.0
      %290 = vmatprep.subr.mxu0 0.0
      %291 = vmatpush1.msra.mxu0 0.0
      %292 = vmatprep.subr.mxu0 0.0
      %293 = vmatpush1.msra.mxu0 0.0
      %294 = vmatprep.subr.mxu0 0.0
      %295 = vmatpush1.msra.mxu0 0.0
      %296 = vmatprep.subr.mxu0 0.0
      %297 = vmatpush1.msra.mxu0 0.0
      %298 = vmatprep.subr.mxu0 0.0
      %299 = vmatpush1.msra.mxu0 0.0
      %300 = vmatprep.subr.mxu0 0.0
      %301 = vmatpush1.msra.mxu0 0.0
      %302 = vmatprep.subr.mxu0 0.0
      %303 = vmatpush1.msra.mxu0 0.0
      %304 = vmatprep.subr.mxu0 0.0
      %305 = vmatpush1.msra.mxu0 0.0
      %306 = vmatprep.subr.mxu0 0.0
      %307 = vmatpush1.msra.mxu0 0.0
      %308 = vmatprep.subr.mxu0 0.0
      %309 = vmatpush1.msra.mxu0 0.0
      %310 = vmatprep.subr.mxu0 0.0
      %311 = vmatpush1.msra.mxu0 0.0
      %312 = vmatprep.subr.mxu0 0.0
      %313 = vmatpush1.msra.mxu0 0.0
      %314 = vmatprep.subr.mxu0 0.0
      %315 = vmatpush1.msra.mxu0 0.0
      %316 = vmatprep.subr.mxu0 0.0
      %317 = vmatpush1.msra.mxu0 0.0
      %318 = vmatprep.subr.mxu0 0.0
      %319 = vmatpush1.msra.mxu0 0.0
      %320 = vmatprep.subr.mxu0 0.0
      %321 = vmatpush1.msra.mxu0 0.0
      %322 = vmatprep.subr.mxu0 0.0
      %323 = vmatpush1.msra.mxu0 0.0
      %324 = vmatprep.subr.mxu0 0.0
      %325 = vmatpush1.msra.mxu0 0.0
      %326 = vmatprep.mubr.f32.mxu0 0.0
      %327 = vmatmul.mubr.f32.gmra.mrb[0].mxu0 %v260
      %v328 = vpop.f32.mrb[0].mxu0
      %v329 = vadd.f32 %v256, %v328
      %v330 = vpop.f32.mrb[0].mxu0
      %331 = vdwg.mxu0
      %vm332 = vcmask 523264
      %333 = vst.msk [vmem:[%s248] sm:$0xff] %vm332, %v329
      %p334 = scmp.lt.s32.totalorder %s19, 1
      %s335 = scalar_select %p334, %s19, 1
      %p336 = scmp.lt.s32.totalorder %s21, 0
      %s337 = scalar_select %p336, %s21, 0
      %p338 = scmp.lt.s32.totalorder %s20, 0
      %s339 = scalar_select %p338, %s20, 0
      %s340 = sadd.s32 %s339, %s337
      %s341 = sadd.s32 %s340, %s335
      %s342 = smul.addr %s341, 8
      %s343 = scalar_lea.vmem %s3, %s342
      // Predicated region
      $region33: #{patch_conv_forward.1} parent=31 // pred_check
        %p344 = pneg %p135
      $region34: #{patch_conv_forward.1} parent=31 // pred_check_branch
        %346 = sbr.rel (%p344) target = $region36
      $region35: #{patch_conv_forward.1} parent=31 // pred_region
        _
      $region36: #{patch_conv_forward.1} parent=31 // pred_fallthru
        _
    $region32: #{patch_conv_forward.1} parent=5 // pred_fallthru
      _
    %p347 = scmp.le.s32.totalorder 2, %s9
    // Predicated region
    $region37: #{patch_conv_forward.1} parent=5 // pred_check
      %p348 = pneg %p347
    $region38: #{patch_conv_forward.1} parent=5 // pred_check_branch
      %350 = sbr.rel (%p348) target = $region40
    $region39: #{patch_conv_forward.1} parent=5 // pred_region
      %s351 = ssub.s32 %s9, 2
      // Predicated region
      $region41: #{patch_conv_forward.1} parent=39 // pred_check
        %p352 = pneg %p141
      $region42: #{patch_conv_forward.1} parent=39 // pred_check_branch
        %354 = sbr.rel (%p352) target = $region44
      $region43: #{patch_conv_forward.1} parent=39 // pred_region
        %p355 = scmp.lt.s32.totalorder %s22, 1
        %s356 = scalar_select %p355, %s22, 1
        %p357 = scmp.lt.s32.totalorder %s24, 0
        %s358 = scalar_select %p357, %s24, 0
        %p359 = scmp.lt.s32.totalorder %s23, 0
        %s360 = scalar_select %p359, %s23, 0
        %s361 = sadd.s32 %s360, %s358
        %s362 = sadd.s32 %s361, %s356
        %s363 = smul.addr %s362, 8
        %s364 = scalar_lea.vmem %s3, %s363
      $region44: #{patch_conv_forward.1} parent=39 // pred_fallthru
        _
    $region40: #{patch_conv_forward.1} parent=5 // pred_fallthru
      _
  $region6: #{patch_conv_forward.1} parent=0 // loop_footer
    %s13 = sadd.s32 1, %s9
  $region7: #{patch_conv_forward.1} parent=0 // loop_footer_branch
    %8 = sbr.rel target = $region3
  $region8: #{patch_conv_forward.1} parent=0 // loop_exit
    _

</llo_original>
